<compile_context>
chip_gen: v7x
topology: tpu7x:2x2x1
jax: 0.10.0
libtpu: 0.0.40
codegen_flags: <defaults>
</compile_context>

<pallas_src>
import jax
import jax.numpy as jnp
from jax.experimental import pallas as pl
from jax.experimental.pallas import tpu as pltpu


D_IN, D_H1, D_H2, D_OUT = 2, 60, 100, 7

DEFAULT_TILE_B = 2048  # lane-axis (batch) tile; multiple of 128


def _mlp_kernel(x_ref, w1_ref, b1_ref, w2_ref, b2_ref, w3_ref, b3_ref, o_ref):
    # Feature-major layout: features on sublanes, batch on lanes (lane-dense).
    x = x_ref[...]  # (2, tb)

    # Layer 1: Linear(2, 60) + tanh   -> (60, tb)
    h1 = jnp.tanh(
        jnp.dot(w1_ref[...], x, preferred_element_type=jnp.float32) + b1_ref[...]
    )
    # Layer 2: Linear(60, 100) + tanh -> (100, tb)
    h2 = jnp.tanh(
        jnp.dot(w2_ref[...], h1, preferred_element_type=jnp.float32) + b2_ref[...]
    )
    # Layer 3: Linear(100, 7) + tanh  -> (7, tb), unmasked full-lane stores
    o_ref[...] = jnp.tanh(
        jnp.dot(w3_ref[...], h2, preferred_element_type=jnp.float32) + b3_ref[...]
    ).astype(o_ref.dtype)


def _choose_tile_b(B, tile_b):
    """Pick a lane-axis tile: multiple of 128 (or the full extent), and
    guarantee >= 2 grid steps for B > 256 so both v7x TensorCores get work."""
    if B <= 256:
        return B  # single full-extent block; splitting would cost more than it saves
    tb = min(tile_b, B)
    if tb >= B:
        # Would collapse to a one-step grid: split roughly in half, 128-aligned.
        half = -(-B // 2)
        tb = ((half + 127) // 128) * 128
        if tb >= B:
            tb = B
    else:
        tb = max(128, (tb // 128) * 128)
    return tb


def mapper_forward(x, params, *, tile_b=DEFAULT_TILE_B):
    """x: (B, 2) float32.
    params: dict of W1,b1,W2,b2,W3,b3 with W stored (out, in) (PyTorch layout)
    and b stored (out, 1).  Returns (B, 7) float32."""
    B = x.shape[0]
    tb = _choose_tile_b(B, tile_b)
    grid = (pl.cdiv(B, tb),)

    # Feature-major view: batch on the lane (last) axis.
    x_t = x.T  # (2, B)

    batch_spec = lambda feat: pl.BlockSpec((feat, tb), lambda i: (0, i))
    const_spec = lambda shape: pl.BlockSpec(shape, lambda i: (0, 0))

    flops = 2 * B * (D_IN * D_H1 + D_H1 * D_H2 + D_H2 * D_OUT)
    transcendentals = B * (D_H1 + D_H2 + D_OUT)
    weight_bytes = 4 * (
        D_IN * D_H1 + D_H1 + D_H1 * D_H2 + D_H2 + D_H2 * D_OUT + D_OUT
    )
    bytes_accessed = B * (D_IN + D_OUT) * 4 + weight_bytes

    out_t = pl.pallas_call(
        _mlp_kernel,
        out_shape=jax.ShapeDtypeStruct((D_OUT, B), jnp.float32),
        grid=grid,
        in_specs=[
            batch_spec(D_IN),           # x^T      : per grid-step lane block
            const_spec((D_H1, D_IN)),   # W1 (60,2): resident across grid steps
            const_spec((D_H1, 1)),      # b1
            const_spec((D_H2, D_H1)),   # W2 (100,60)
            const_spec((D_H2, 1)),      # b2
            const_spec((D_OUT, D_H2)),  # W3 (7,100)
            const_spec((D_OUT, 1)),     # b3
        ],
        out_specs=batch_spec(D_OUT),
        compiler_params=pltpu.CompilerParams(
            dimension_semantics=("parallel",),   # shard batch tiles across TCs on v7x
            vmem_limit_bytes=32 * 1024 * 1024,   # fits v7x's 32 MiB scoped VMEM
        ),
        cost_estimate=pl.CostEstimate(
            flops=flops,
            transcendentals=transcendentals,
            bytes_accessed=bytes_accessed,
        ),
    )(x_t, params["W1"], params["b1"], params["W2"], params["b2"],
      params["W3"], params["b3"])

    return out_t.T  # (B, 7)


def init_params(key):
    """Deterministic init mimicking torch.nn.Linear default U[-1/sqrt(in), 1/sqrt(in)].
    Weights are (out, in) and biases (out, 1), matching the kernel layout."""
    ks = jax.random.split(key, 6)

    def linear(kw, kb, fan_in, fan_out):
        bound = 1.0 / jnp.sqrt(fan_in)
        W = jax.random.uniform(kw, (fan_out, fan_in), jnp.float32, -bound, bound)
        b = jax.random.uniform(kb, (fan_out, 1), jnp.float32, -bound, bound)
        return W, b

    W1, b1 = linear(ks[0], ks[1], D_IN, D_H1)
    W2, b2 = linear(ks[2], ks[3], D_H1, D_H2)
    W3, b3 = linear(ks[4], ks[5], D_H2, D_OUT)
    return dict(W1=W1, b1=b1, W2=W2, b2=b2, W3=W3, b3=b3)


def reference_forward(x, p):
    h1 = jnp.tanh(x @ p["W1"].T + p["b1"].T)
    h2 = jnp.tanh(h1 @ p["W2"].T + p["b2"].T)
    return jnp.tanh(h2 @ p["W3"].T + p["b3"].T)


if __name__ == "__main__":
    key = jax.random.PRNGKey(0)
    k_param, k_x = jax.random.split(key)

    params = init_params(k_param)

    # Small batch of 2-D points, consistent with Mapper's Linear(2, ...) input.
    x = jax.random.normal(k_x, (8, D_IN), jnp.float32)
    out = jax.block_until_ready(mapper_forward(x, params))
    ref = reference_forward(x, params)
    assert out.shape == (8, D_OUT)
    assert jnp.allclose(out, ref, atol=1e-5, rtol=1e-5)

    # Multi-block (gridded) path: batch splits into >= 2 lane tiles.
    xb = jax.random.normal(jax.random.PRNGKey(1), (1024, D_IN), jnp.float32)
    outb = jax.block_until_ready(mapper_forward(xb, params))
    assert outb.shape == (1024, D_OUT)
    assert jnp.allclose(outb, reference_forward(xb, params), atol=1e-5, rtol=1e-5)

    # Ragged last block: batch not a multiple of the lane tile.
    xr = jax.random.normal(jax.random.PRNGKey(2), (1000, D_IN), jnp.float32)
    outr = jax.block_until_ready(mapper_forward(xr, params))
    assert outr.shape == (1000, D_OUT)
    assert jnp.allclose(outr, reference_forward(xr, params), atol=1e-5, rtol=1e-5)

    print("KERNEL_OK")
</pallas_src>

<mosaic_0001>
module attributes {stable_mosaic.version = 11 : i64} {
  func.func @_mlp_kernel(%arg0: i32, %arg1: memref<2x8xf32, #tpu.memory_space<vmem>>, %arg2: memref<60x2xf32, #tpu.memory_space<vmem>>, %arg3: memref<60x1xf32, #tpu.memory_space<vmem>>, %arg4: memref<100x60xf32, #tpu.memory_space<vmem>>, %arg5: memref<100x1xf32, #tpu.memory_space<vmem>>, %arg6: memref<7x100xf32, #tpu.memory_space<vmem>>, %arg7: memref<7x1xf32, #tpu.memory_space<vmem>>, %arg8: memref<7x8xf32, #tpu.memory_space<vmem>>) attributes {dimension_semantics = [#tpu.dimension_semantics<parallel>], iteration_bounds = array<i64: 1>, scalar_prefetch = 0 : i64, scratch_operands = 0 : i64, tpu.core_type = #tpu.core_type<tc>, window_params = [{transform_indices = @transform_0, window_bounds = array<i64: 2, 8>}, {pipeline_mode = #tpu.pipeline_mode<synchronous>, transform_indices = @transform_1, window_bounds = array<i64: 60, 2>}, {pipeline_mode = #tpu.pipeline_mode<synchronous>, transform_indices = @transform_2, window_bounds = array<i64: 60, 1>}, {pipeline_mode = #tpu.pipeline_mode<synchronous>, transform_indices = @transform_3, window_bounds = array<i64: 100, 60>}, {pipeline_mode = #tpu.pipeline_mode<synchronous>, transform_indices = @transform_4, window_bounds = array<i64: 100, 1>}, {pipeline_mode = #tpu.pipeline_mode<synchronous>, transform_indices = @transform_5, window_bounds = array<i64: 7, 100>}, {pipeline_mode = #tpu.pipeline_mode<synchronous>, transform_indices = @transform_6, window_bounds = array<i64: 7, 1>}, {transform_indices = @transform_7, window_bounds = array<i64: 7, 8>}]} {
    %c0 = arith.constant 0 : index
    %c0_0 = arith.constant 0 : index
    %0 = vector.load %arg1[%c0, %c0_0] : memref<2x8xf32, #tpu.memory_space<vmem>>, vector<2x8xf32>
    %c0_1 = arith.constant 0 : index
    %c0_2 = arith.constant 0 : index
    %1 = vector.load %arg2[%c0_1, %c0_2] : memref<60x2xf32, #tpu.memory_space<vmem>>, vector<60x2xf32>
    %cst = arith.constant dense<0.000000e+00> : vector<60x8xf32>
    %2 = tpu.matmul %1, %0, %cst {dimension_numbers = #tpu.dot_dimension_numbers<[1], [0], [0], [1], [0, 0, 1, 1], [], []>} : vector<60x2xf32>, vector<2x8xf32>, vector<60x8xf32> -> vector<60x8xf32>
    %c0_3 = arith.constant 0 : index
    %c0_4 = arith.constant 0 : index
    %3 = vector.load %arg3[%c0_3, %c0_4] : memref<60x1xf32, #tpu.memory_space<vmem>>, vector<60x1xf32>
    %4 = vector.broadcast %3 : vector<60x1xf32> to vector<60x8xf32>
    %5 = arith.addf %2, %4 : vector<60x8xf32>
    %6 = math.tanh %5 : vector<60x8xf32>
    %c0_5 = arith.constant 0 : index
    %c0_6 = arith.constant 0 : index
    %7 = vector.load %arg4[%c0_5, %c0_6] : memref<100x60xf32, #tpu.memory_space<vmem>>, vector<100x60xf32>
    %cst_7 = arith.constant dense<0.000000e+00> : vector<100x8xf32>
    %8 = tpu.matmul %7, %6, %cst_7 {dimension_numbers = #tpu.dot_dimension_numbers<[1], [0], [0], [1], [0, 0, 1, 1], [], []>} : vector<100x60xf32>, vector<60x8xf32>, vector<100x8xf32> -> vector<100x8xf32>
    %c0_8 = arith.constant 0 : index
    %c0_9 = arith.constant 0 : index
    %9 = vector.load %arg5[%c0_8, %c0_9] : memref<100x1xf32, #tpu.memory_space<vmem>>, vector<100x1xf32>
    %10 = vector.broadcast %9 : vector<100x1xf32> to vector<100x8xf32>
    %11 = arith.addf %8, %10 : vector<100x8xf32>
    %12 = math.tanh %11 : vector<100x8xf32>
    %c0_10 = arith.constant 0 : index
    %c0_11 = arith.constant 0 : index
    %13 = vector.load %arg6[%c0_10, %c0_11] : memref<7x100xf32, #tpu.memory_space<vmem>>, vector<7x100xf32>
    %cst_12 = arith.constant dense<0.000000e+00> : vector<7x8xf32>
    %14 = tpu.matmul %13, %12, %cst_12 {dimension_numbers = #tpu.dot_dimension_numbers<[1], [0], [0], [1], [0, 0, 1, 1], [], []>} : vector<7x100xf32>, vector<100x8xf32>, vector<7x8xf32> -> vector<7x8xf32>
    %c0_13 = arith.constant 0 : index
    %c0_14 = arith.constant 0 : index
    %15 = vector.load %arg7[%c0_13, %c0_14] : memref<7x1xf32, #tpu.memory_space<vmem>>, vector<7x1xf32>
    %16 = vector.broadcast %15 : vector<7x1xf32> to vector<7x8xf32>
    %17 = arith.addf %14, %16 : vector<7x8xf32>
    %18 = math.tanh %17 : vector<7x8xf32>
    %c0_15 = arith.constant 0 : index
    %c0_16 = arith.constant 0 : index
    %19 = vector.load %arg8[%c0_15, %c0_16] : memref<7x8xf32, #tpu.memory_space<vmem>>, vector<7x8xf32>
    tpu.vector_store %arg8[%c0_15, %c0_16], %18 {strides = array<i32>} : memref<7x8xf32, #tpu.memory_space<vmem>>, vector<7x8xf32>,
    return
  }
  func.func @transform_0(%arg0: i32) -> (i32, i32) {
    %c0_i32 = arith.constant 0 : i32
    %c0_i32_0 = arith.constant 0 : i32
    return %c0_i32, %arg0 : i32, i32
  }
  func.func @transform_1(%arg0: i32) -> (i32, i32) {
    %c0_i32 = arith.constant 0 : i32
    %c0_i32_0 = arith.constant 0 : i32
    %c0_i32_1 = arith.constant 0 : i32
    return %c0_i32, %c0_i32_0 : i32, i32
  }
  func.func @transform_2(%arg0: i32) -> (i32, i32) {
    %c0_i32 = arith.constant 0 : i32
    %c0_i32_0 = arith.constant 0 : i32
    %c0_i32_1 = arith.constant 0 : i32
    return %c0_i32, %c0_i32_0 : i32, i32
  }
  func.func @transform_3(%arg0: i32) -> (i32, i32) {
    %c0_i32 = arith.constant 0 : i32
    %c0_i32_0 = arith.constant 0 : i32
    %c0_i32_1 = arith.constant 0 : i32
    return %c0_i32, %c0_i32_0 : i32, i32
  }
  func.func @transform_4(%arg0: i32) -> (i32, i32) {
    %c0_i32 = arith.constant 0 : i32
    %c0_i32_0 = arith.constant 0 : i32
    %c0_i32_1 = arith.constant 0 : i32
    return %c0_i32, %c0_i32_0 : i32, i32
  }
  func.func @transform_5(%arg0: i32) -> (i32, i32) {
    %c0_i32 = arith.constant 0 : i32
    %c0_i32_0 = arith.constant 0 : i32
    %c0_i32_1 = arith.constant 0 : i32
    return %c0_i32, %c0_i32_0 : i32, i32
  }
  func.func @transform_6(%arg0: i32) -> (i32, i32) {
    %c0_i32 = arith.constant 0 : i32
    %c0_i32_0 = arith.constant 0 : i32
    %c0_i32_1 = arith.constant 0 : i32
    return %c0_i32, %c0_i32_0 : i32, i32
  }
  func.func @transform_7(%arg0: i32) -> (i32, i32) {
    %c0_i32 = arith.constant 0 : i32
    %c0_i32_0 = arith.constant 0 : i32
    return %c0_i32, %arg0 : i32, i32
  }
}

</mosaic_0001>

<llo_original>
// kernel: tpu_custom_call.1
$region0: #{tpu_custom_call.1}
  #allocation0 [shape = 'u32[]', space=smem, size = 0x4, offset = 0x4, fixed_abs, tag = 'smem constant byte address 0x4 - core index']
  #allocation1 [shape = 'u32[144,128]{1,0:T(1,128)}', space=vmem, size = 0x12000, scoped, tag = 'internal scratch']
  %s0 = inlined_call_operand.vmem [shape: f32[2,8], index: 0, kind: input, shape index: {}]
  %s1 = inlined_call_operand.vmem [shape: f32[60,2], index: 1, kind: input, shape index: {}]
  %s2 = inlined_call_operand.vmem [shape: f32[60,1], index: 2, kind: input, shape index: {}]
  %s3 = inlined_call_operand.vmem [shape: f32[100,60], index: 3, kind: input, shape index: {}]
  %s4 = inlined_call_operand.vmem [shape: f32[100,1], index: 4, kind: input, shape index: {}]
  %s5 = inlined_call_operand.vmem [shape: f32[7,100], index: 5, kind: input, shape index: {}]
  %s6 = inlined_call_operand.vmem [shape: f32[7,1], index: 6, kind: input, shape index: {}]
  %s7 = inlined_call_operand.hbm [shape: f32[7,8], index: 7, kind: output, shape index: {}]
  %s8 = sld [smem:[#allocation0]]
  $region38: #{tpu_custom_call.1} parent=0
    _
  %s10 = ssub.s32 1, %s8
  %s11 = scalar_select 0, %s10, %s8
  $region1: #{tpu_custom_call.1} parent=0
    #allocation2 [shape = 'u8[4096]{0}', space=vmem, size = 0x1000, scoped, tag = 'output window, operand 0, single buffered']
    #allocation3 [shape = 's32[1]{0}', space=sflag, size = 0x4, scoped, tag = 'scoped memory for tpu_custom_call.1']
    %12 = vsyncpa [#allocation3], 0
    // Predicated region
    $region2: #{tpu_custom_call.1} parent=1 // pred_check
      _
    $region3: #{tpu_custom_call.1} parent=1 // pred_check_branch
      %14 = sbr.rel (0) target = $region5
    $region4: #{tpu_custom_call.1} parent=1 // pred_region
      _
    $region5: #{tpu_custom_call.1} parent=1 // pred_fallthru
      _
    // Predicated region
    $region6: #{tpu_custom_call.1} parent=1 // pred_check
      _
    $region7: #{tpu_custom_call.1} parent=1 // pred_check_branch
      %16 = sbr.rel (0) target = $region9
    $region8: #{tpu_custom_call.1} parent=1 // pred_region
      _
    $region9: #{tpu_custom_call.1} parent=1 // pred_fallthru
      _
    // Predicated region
    $region10: #{tpu_custom_call.1} parent=1 // pred_check
      _
    $region11: #{tpu_custom_call.1} parent=1 // pred_check_branch
      %18 = sbr.rel (0) target = $region13
    $region12: #{tpu_custom_call.1} parent=1 // pred_region
      _
    $region13: #{tpu_custom_call.1} parent=1 // pred_fallthru
      _
    // Predicated region
    $region14: #{tpu_custom_call.1} parent=1 // pred_check
      _
    $region15: #{tpu_custom_call.1} parent=1 // pred_check_branch
      %20 = sbr.rel (0) target = $region17
    $region16: #{tpu_custom_call.1} parent=1 // pred_region
      _
    $region17: #{tpu_custom_call.1} parent=1 // pred_fallthru
      _
    // Predicated region
    $region18: #{tpu_custom_call.1} parent=1 // pred_check
      _
    $region19: #{tpu_custom_call.1} parent=1 // pred_check_branch
      %22 = sbr.rel (0) target = $region21
    $region20: #{tpu_custom_call.1} parent=1 // pred_region
      _
    $region21: #{tpu_custom_call.1} parent=1 // pred_fallthru
      _
    // Predicated region
    $region22: #{tpu_custom_call.1} parent=1 // pred_check
      _
    $region23: #{tpu_custom_call.1} parent=1 // pred_check_branch
      %24 = sbr.rel (0) target = $region25
    $region24: #{tpu_custom_call.1} parent=1 // pred_region
      _
    $region25: #{tpu_custom_call.1} parent=1 // pred_fallthru
      _
    // Predicated region
    $region26: #{tpu_custom_call.1} parent=1 // pred_check
      _
    $region27: #{tpu_custom_call.1} parent=1 // pred_check_branch
      %26 = sbr.rel (0) target = $region29
    $region28: #{tpu_custom_call.1} parent=1 // pred_region
      _
    $region29: #{tpu_custom_call.1} parent=1 // pred_fallthru
      _
    %v27 = vld [vmem:[%s0] sm:$0x3]
    %v28 = vld [vmem:[%s1] sm:$0xff]
    %v29 = vld [vmem:[%s1 + $0x8] sm:$0xff]
    %v30 = vld [vmem:[%s1 + $0x10] sm:$0xff]
    %v31 = vld [vmem:[%s1 + $0x18] sm:$0xff]
    %v32 = vld [vmem:[%s1 + $0x20] sm:$0xff]
    %v33 = vld [vmem:[%s1 + $0x28] sm:$0xff]
    %v34 = vld [vmem:[%s1 + $0x30] sm:$0xff]
    %v35 = vld [vmem:[%s1 + $0x38] sm:$0xf]
    %v36 = vld [vmem:[%s2] sm:$0xff]
    %v37 = vld [vmem:[%s2 + $0x8] sm:$0xff]
    %v38 = vld [vmem:[%s2 + $0x10] sm:$0xff]
    %v39 = vld [vmem:[%s2 + $0x18] sm:$0xff]
    %v40 = vld [vmem:[%s2 + $0x20] sm:$0xff]
    %v41 = vld [vmem:[%s2 + $0x28] sm:$0xff]
    %v42 = vld [vmem:[%s2 + $0x30] sm:$0xff]
    %v43 = vld [vmem:[%s2 + $0x38] sm:$0xf]
    %45 = vset.pattern.permute.xlu0 0
    %46 = vperm.xlu0 %45, %v36
    %v47 = vpop.permute.xlu0 %46
    %50 = vset.pattern.permute.xlu0 0
    %51 = vperm.xlu0 %50, %v37
    %v52 = vpop.permute.xlu0 %51
    %55 = vset.pattern.permute.xlu0 0
    %56 = vperm.xlu0 %55, %v38
    %v57 = vpop.permute.xlu0 %56
    %60 = vset.pattern.permute.xlu0 0
    %61 = vperm.xlu0 %60, %v39
    %v62 = vpop.permute.xlu0 %61
    %65 = vset.pattern.permute.xlu0 0
    %66 = vperm.xlu0 %65, %v40
    %v67 = vpop.permute.xlu0 %66
    %70 = vset.pattern.permute.xlu0 0
    %71 = vperm.xlu0 %70, %v41
    %v72 = vpop.permute.xlu0 %71
    %75 = vset.pattern.permute.xlu0 0
    %76 = vperm.xlu0 %75, %v42
    %v77 = vpop.permute.xlu0 %76
    %80 = vset.pattern.permute.xlu0 0
    %81 = vperm.xlu0 %80, %v43
    %v82 = vpop.permute.xlu0 %81
    %vm84 = vcmask 15360
    %v86 = vsel %vm84, %v28, 0
    %v89 = vsel %vm84, %v29, 0
    %v92 = vsel %vm84, %v30, 0
    %v95 = vsel %vm84, %v31, 0
    %v98 = vsel %vm84, %v32, 0
    %v101 = vsel %vm84, %v33, 0
    %v104 = vsel %vm84, %v34, 0
    %v107 = vsel %vm84, %v35, 0
    %vm109 = vcmask 1041408
    %v111 = vsel %vm109, %v27, 0
    %113 = vmatprep.subr.mxu0 0.0
    %114 = vmatpush1.msra.mxu0 %v111
    %115 = vmatprep.subr.mxu0 0.0
    %116 = vmatpush1.msra.mxu0 0.0
    %117 = vmatprep.subr.mxu0 0.0
    %118 = vmatpush1.msra.mxu0 0.0
    %119 = vmatprep.subr.mxu0 0.0
    %120 = vmatpush1.msra.mxu0 0.0
    %121 = vmatprep.subr.mxu0 0.0
    %122 = vmatpush1.msra.mxu0 0.0
    %123 = vmatprep.subr.mxu0 0.0
    %124 = vmatpush1.msra.mxu0 0.0
    %125 = vmatprep.subr.mxu0 0.0
    %126 = vmatpush1.msra.mxu0 0.0
    %127 = vmatprep.subr.mxu0 0.0
    %128 = vmatpush1.msra.mxu0 0.0
    %129 = vmatprep.subr.mxu0 0.0
    %130 = vmatpush1.msra.mxu0 0.0
    %131 = vmatprep.subr.mxu0 0.0
    %132 = vmatpush1.msra.mxu0 0.0
    %133 = vmatprep.subr.mxu0 0.0
    %134 = vmatpush1.msra.mxu0 0.0
    %135 = vmatprep.subr.mxu0 0.0
    %136 = vmatpush1.msra.mxu0 0.0
    %137 = vmatprep.subr.mxu0 0.0
    %138 = vmatpush1.msra.mxu0 0.0
    %139 = vmatprep.subr.mxu0 0.0
    %140 = vmatpush1.msra.mxu0 0.0
    %141 = vmatprep.subr.mxu0 0.0
    %142 = vmatpush1.msra.mxu0 0.0
    %143 = vmatprep.subr.mxu0 0.0
    %144 = vmatpush1.msra.mxu0 0.0
    %145 = vmatprep.subr.mxu0 0.0
    %146 = vmatpush1.msra.mxu0 0.0
    %147 = vmatprep.subr.mxu0 0.0
    %148 = vmatpush1.msra.mxu0 0.0
    %149 = vmatprep.subr.mxu0 0.0
    %150 = vmatpush1.msra.mxu0 0.0
    %151 = vmatprep.subr.mxu0 0.0
    %152 = vmatpush1.msra.mxu0 0.0
    %153 = vmatprep.subr.mxu0 0.0
    %154 = vmatpush1.msra.mxu0 0.0
    %155 = vmatprep.subr.mxu0 0.0
    %156 = vmatpush1.msra.mxu0 0.0
    %157 = vmatprep.subr.mxu0 0.0
    %158 = vmatpush1.msra.mxu0 0.0
    %159 = vmatprep.subr.mxu0 0.0
    %160 = vmatpush1.msra.mxu0 0.0
    %161 = vmatprep.subr.mxu0 0.0
    %162 = vmatpush1.msra.mxu0 0.0
    %163 = vmatprep.subr.mxu0 0.0
    %164 = vmatpush1.msra.mxu0 0.0
    %165 = vmatprep.subr.mxu0 0.0
    %166 = vmatpush1.msra.mxu0 0.0
    %167 = vmatprep.subr.mxu0 0.0
    %168 = vmatpush1.msra.mxu0 0.0
    %169 = vmatprep.subr.mxu0 0.0
    %170 = vmatpush1.msra.mxu0 0.0
    %171 = vmatprep.subr.mxu0 0.0
    %172 = vmatpush1.msra.mxu0 0.0
    %173 = vmatprep.subr.mxu0 0.0
    %174 = vmatpush1.msra.mxu0 0.0
    %175 = vmatprep.subr.mxu0 0.0
    %176 = vmatpush1.msra.mxu0 0.0
    %177 = vmatprep.mubr.f32.mxu0 0.0
    %178 = vmatmul.mubr.f32.gmra.mrb[0].mxu0 %v86
    %v179 = vpop.f32.mrb[0].mxu0
    %v180 = vadd.f32 %v47, %v179
    %v181 = vpop.f32.mrb[0].mxu0
    %182 = vmatprep.mubr.f32.mxu0 0.0
    %183 = vmatmul.mubr.f32.gmra.mrb[0].mxu0 %v89
    %v184 = vpop.f32.mrb[0].mxu0
    %v185 = vadd.f32 %v52, %v184
    %v186 = vpop.f32.mrb[0].mxu0
    %187 = vmatprep.mubr.f32.mxu0 0.0
    %188 = vmatmul.mubr.f32.gmra.mrb[0].mxu0 %v92
    %v189 = vpop.f32.mrb[0].mxu0
    %v190 = vadd.f32 %v57, %v189
    %v191 = vpop.f32.mrb[0].mxu0
    %192 = vmatprep.mubr.f32.mxu0 0.0
    %193 = vmatmul.mubr.f32.gmra.mrb[0].mxu0 %v95
    %v194 = vpop.f32.mrb[0].mxu0
    %v195 = vadd.f32 %v62, %v194
    %v196 = vpop.f32.mrb[0].mxu0
    %197 = vmatprep.mubr.f32.mxu0 0.0
    %198 = vmatmul.mubr.f32.gmra.mrb[0].mxu0 %v98
    %v199 = vpop.f32.mrb[0].mxu0
    %v200 = vadd.f32 %v67, %v199
    %v201 = vpop.f32.mrb[0].mxu0
    %202 = vmatprep.mubr.f32.mxu0 0.0
    %203 = vmatmul.mubr.f32.gmra.mrb[0].mxu0 %v101
    %v204 = vpop.f32.mrb[0].mxu0
    %v205 = vadd.f32 %v72, %v204
    %v206 = vpop.f32.mrb[0].mxu0
    %207 = vmatprep.mubr.f32.mxu0 0.0
    %208 = vmatmul.mubr.f32.gmra.mrb[0].mxu0 %v104
    %v209 = vpop.f32.mrb[0].mxu0
    %v210 = vadd.f32 %v77, %v209
    %v211 = vpop.f32.mrb[0].mxu0
    %212 = vmatprep.mubr.f32.mxu0 0.0
    %213 = vmatmul.mubr.f32.gmra.mrb[0].mxu0 %v107
    %v214 = vpop.f32.mrb[0].mxu0
    %v215 = vadd.f32 %v82, %v214
    %v216 = vpop.f32.mrb[0].mxu0
    %217 = vdwg.mxu0
    %v218 = vtanh.pop %v180
    %v219 = vtanh.pop %v185
    %v220 = vtanh.pop %v190
    %v221 = vtanh.pop %v195
    %v222 = vtanh.pop %v200
    %v223 = vtanh.pop %v205
    %v224 = vtanh.pop %v210
    %v225 = vtanh.pop %v215
    %v226 = vld [vmem:[%s3] sm:$0xff]
    %v227 = vld [vmem:[%s3 + $0x8] sm:$0xff]
    %v228 = vld [vmem:[%s3 + $0x10] sm:$0xff]
    %v229 = vld [vmem:[%s3 + $0x18] sm:$0xff]
    %v230 = vld [vmem:[%s3 + $0x20] sm:$0xff]
    %v231 = vld [vmem:[%s3 + $0x28] sm:$0xff]
    %v232 = vld [vmem:[%s3 + $0x30] sm:$0xff]
    %v233 = vld [vmem:[%s3 + $0x38] sm:$0xff]
    %v234 = vld [vmem:[%s3 + $0x40] sm:$0xff]
    %v235 = vld [vmem:[%s3 + $0x48] sm:$0xff]
    %v236 = vld [vmem:[%s3 + $0x50] sm:$0xff]
    %v237 = vld [vmem:[%s3 + $0x58] sm:$0xff]
    %v238 = vld [vmem:[%s3 + $0x60] sm:$0xf]
    %v239 = vld [vmem:[%s4] sm:$0xff]
    %v240 = vld [vmem:[%s4 + $0x8] sm:$0xff]
    %v241 = vld [vmem:[%s4 + $0x10] sm:$0xff]
    %v242 = vld [vmem:[%s4 + $0x18] sm:$0xff]
    %v243 = vld [vmem:[%s4 + $0x20] sm:$0xff]
    %v244 = vld [vmem:[%s4 + $0x28] sm:$0xff]
    %v245 = vld [vmem:[%s4 + $0x30] sm:$0xff]
    %v246 = vld [vmem:[%s4 + $0x38] sm:$0xff]
    %v247 = vld [vmem:[%s4 + $0x40] sm:$0xff]
    %v248 = vld [vmem:[%s4 + $0x48] sm:$0xff]
    %v249 = vld [vmem:[%s4 + $0x50] sm:$0xff]
    %v250 = vld [vmem:[%s4 + $0x58] sm:$0xff]
    %v251 = vld [vmem:[%s4 + $0x60] sm:$0xf]
    %253 = vset.pattern.permute.xlu0 0
    %254 = vperm.xlu0 %253, %v239
    %v255 = vpop.permute.xlu0 %254
    %258 = vset.pattern.permute.xlu0 0
    %259 = vperm.xlu0 %258, %v240
    %v260 = vpop.permute.xlu0 %259
    %263 = vset.pattern.permute.xlu0 0
    %264 = vperm.xlu0 %263, %v241
    %v265 = vpop.permute.xlu0 %264
    %268 = vset.pattern.permute.xlu0 0
    %269 = vperm.xlu0 %268, %v242
    %v270 = vpop.permute.xlu0 %269
    %273 = vset.pattern.permute.xlu0 0
    %274 = vperm.xlu0 %273, %v243
    %v275 = vpop.permute.xlu0 %274
    %278 = vset.pattern.permute.xlu0 0
    %279 = vperm.xlu0 %278, %v244
    %v280 = vpop.permute.xlu0 %279
    %283 = vset.pattern.permute.xlu0 0
    %284 = vperm.xlu0 %283, %v245
    %v285 = vpop.permute.xlu0 %284
    %288 = vset.pattern.permute.xlu0 0
    %289 = vperm.xlu0 %288, %v246
    %v290 = vpop.permute.xlu0 %289
    %293 = vset.pattern.permute.xlu0 0
    %294 = vperm.xlu0 %293, %v247
    %v295 = vpop.permute.xlu0 %294
    %298 = vset.pattern.permute.xlu0 0
    %299 = vperm.xlu0 %298, %v248
    %v300 = vpop.permute.xlu0 %299
    %303 = vset.pattern.permute.xlu0 0
    %304 = vperm.xlu0 %303, %v249
    %v305 = vpop.permute.xlu0 %304
    %308 = vset.pattern.permute.xlu0 0
    %309 = vperm.xlu0 %308, %v250
    %v310 = vpop.permute.xlu0 %309
    %313 = vset.pattern.permute.xlu0 0
    %314 = vperm.xlu0 %313, %v251
    %v315 = vpop.permute.xlu0 %314
    %vm317 = vcmask 490496
    %v319 = vsel %vm317, %v226, 0
    %v322 = vsel %vm317, %v227, 0
    %v325 = vsel %vm317, %v228, 0
    %v328 = vsel %vm317, %v229, 0
    %v331 = vsel %vm317, %v230, 0
    %v334 = vsel %vm317, %v231, 0
    %v337 = vsel %vm317, %v232, 0
    %v340 = vsel %vm317, %v233, 0
    %v343 = vsel %vm317, %v234, 0
    %v346 = vsel %vm317, %v235, 0
    %v349 = vsel %vm317, %v236, 0
    %v352 = vsel %vm317, %v237, 0
    %v355 = vsel %vm317, %v238, 0
    %vm357 = vcmask 1043456
    %v359 = vsel %vm357, %v225, 0
    %361 = vmatprep.subr.mxu0 0.0
    %362 = vmatpush1.msra.mxu0 %v218
    %363 = vmatprep.subr.mxu0 0.0
    %364 = vmatpush1.msra.mxu0 %v219
    %365 = vmatprep.subr.mxu0 0.0
    %366 = vmatpush1.msra.mxu0 %v220
    %367 = vmatprep.subr.mxu0 0.0
    %368 = vmatpush1.msra.mxu0 %v221
    %369 = vmatprep.subr.mxu0 0.0
    %370 = vmatpush1.msra.mxu0 %v222
    %371 = vmatprep.subr.mxu0 0.0
    %372 = vmatpush1.msra.mxu0 %v223
    %373 = vmatprep.subr.mxu0 0.0
    %374 = vmatpush1.msra.mxu0 %v224
    %375 = vmatprep.subr.mxu0 0.0
    %376 = vmatpush1.msra.mxu0 %v359
    %377 = vmatprep.subr.mxu0 0.0
    %378 = vmatpush1.msra.mxu0 0.0
    %379 = vmatprep.subr.mxu0 0.0
    %380 = vmatpush1.msra.mxu0 0.0
    %381 = vmatprep.subr.mxu0 0.0
    %382 = vmatpush1.msra.mxu0 0.0
    %383 = vmatprep.subr.mxu0 0.0
    %384 = vmatpush1.msra.mxu0 0.0
    %385 = vmatprep.subr.mxu0 0.0
    %386 = vmatpush1.msra.mxu0 0.0
    %387 = vmatprep.subr.mxu0 0.0
    %388 = vmatpush1.msra.mxu0 0.0
    %389 = vmatprep.subr.mxu0 0.0
    %390 = vmatpush1.msra.mxu0 0.0
    %391 = vmatprep.subr.mxu0 0.0
    %392 = vmatpush1.msra.mxu0 0.0
    %393 = vmatprep.subr.mxu0 0.0
    %394 = vmatpush1.msra.mxu0 0.0
    %395 = vmatprep.subr.mxu0 0.0
    %396 = vmatpush1.msra.mxu0 0.0
    %397 = vmatprep.subr.mxu0 0.0
    %398 = vmatpush1.msra.mxu0 0.0
    %399 = vmatprep.subr.mxu0 0.0
    %400 = vmatpush1.msra.mxu0 0.0
    %401 = vmatprep.subr.mxu0 0.0
    %402 = vmatpush1.msra.mxu0 0.0
    %403 = vmatprep.subr.mxu0 0.0
    %404 = vmatpush1.msra.mxu0 0.0
    %405 = vmatprep.subr.mxu0 0.0
    %406 = vmatpush1.msra.mxu0 0.0
    %407 = vmatprep.subr.mxu0 0.0
    %408 = vmatpush1.msra.mxu0 0.0
    %409 = vmatprep.subr.mxu0 0.0
    %410 = vmatpush1.msra.mxu0 0.0
    %411 = vmatprep.subr.mxu0 0.0
    %412 = vmatpush1.msra.mxu0 0.0
    %413 = vmatprep.subr.mxu0 0.0
    %414 = vmatpush1.msra.mxu0 0.0
    %415 = vmatprep.subr.mxu0 0.0
    %416 = vmatpush1.msra.mxu0 0.0
    %417 = vmatprep.subr.mxu0 0.0
    %418 = vmatpush1.msra.mxu0 0.0
    %419 = vmatprep.subr.mxu0 0.0
    %420 = vmatpush1.msra.mxu0 0.0
    %421 = vmatprep.subr.mxu0 0.0
    %422 = vmatpush1.msra.mxu0 0.0
    %423 = vmatprep.subr.mxu0 0.0
    %424 = vmatpush1.msra.mxu0 0.0
    %425 = vmatprep.mubr.f32.mxu0 0.0
    %426 = vmatmul.mubr.f32.gmra.mrb[0].mxu0 %v319
    %v427 = vpop.f32.mrb[0].mxu0
    %v428 = vadd.f32 %v255, %v427
    %v429 = vpop.f32.mrb[0].mxu0
    %430 = vmatprep.mubr.f32.mxu0 0.0
    %431 = vmatmul.mubr.f32.gmra.mrb[0].mxu0 %v322
    %v432 = vpop.f32.mrb[0].mxu0
    %v433 = vadd.f32 %v260, %v432
    %v434 = vpop.f32.mrb[0].mxu0
    %435 = vmatprep.mubr.f32.mxu0 0.0
    %436 = vmatmul.mubr.f32.gmra.mrb[0].mxu0 %v325
    %v437 = vpop.f32.mrb[0].mxu0
    %v438 = vadd.f32 %v265, %v437
    %v439 = vpop.f32.mrb[0].mxu0
    %440 = vmatprep.mubr.f32.mxu0 0.0
    %441 = vmatmul.mubr.f32.gmra.mrb[0].mxu0 %v328
    %v442 = vpop.f32.mrb[0].mxu0
    %v443 = vadd.f32 %v270, %v442
    %v444 = vpop.f32.mrb[0].mxu0
    %445 = vmatprep.mubr.f32.mxu0 0.0
    %446 = vmatmul.mubr.f32.gmra.mrb[0].mxu0 %v331
    %v447 = vpop.f32.mrb[0].mxu0
    %v448 = vadd.f32 %v275, %v447
    %v449 = vpop.f32.mrb[0].mxu0
    %450 = vmatprep.mubr.f32.mxu0 0.0
    %451 = vmatmul.mubr.f32.gmra.mrb[0].mxu0 %v334
    %v452 = vpop.f32.mrb[0].mxu0
    %v453 = vadd.f32 %v280, %v452
    %v454 = vpop.f32.mrb[0].mxu0
    %455 = vmatprep.mubr.f32.mxu0 0.0
    %456 = vmatmul.mubr.f32.gmra.mrb[0].mxu0 %v337
    %v457 = vpop.f32.mrb[0].mxu0
    %v458 = vadd.f32 %v285, %v457
    %v459 = vpop.f32.mrb[0].mxu0
    %460 = vmatprep.mubr.f32.mxu0 0.0
    %461 = vmatmul.mubr.f32.gmra.mrb[0].mxu0 %v340
    %v462 = vpop.f32.mrb[0].mxu0
    %v463 = vadd.f32 %v290, %v462
    %v464 = vpop.f32.mrb[0].mxu0
    %465 = vmatprep.mubr.f32.mxu0 0.0
    %466 = vmatmul.mubr.f32.gmra.mrb[0].mxu0 %v343
    %v467 = vpop.f32.mrb[0].mxu0
    %v468 = vadd.f32 %v295, %v467
    %v469 = vpop.f32.mrb[0].mxu0
    %470 = vmatprep.mubr.f32.mxu0 0.0
    %471 = vmatmul.mubr.f32.gmra.mrb[0].mxu0 %v346
    %v472 = vpop.f32.mrb[0].mxu0
    %v473 = vadd.f32 %v300, %v472
    %v474 = vpop.f32.mrb[0].mxu0
    %475 = vmatprep.mubr.f32.mxu0 0.0
    %476 = vmatmul.mubr.f32.gmra.mrb[0].mxu0 %v349
    %v477 = vpop.f32.mrb[0].mxu0
    %v478 = vadd.f32 %v305, %v477
    %v479 = vpop.f32.mrb[0].mxu0
    %480 = vmatprep.mubr.f32.mxu0 0.0
    %481 = vmatmul.mubr.f32.gmra.mrb[0].mxu0 %v352
    %v482 = vpop.f32.mrb[0].mxu0
    %v483 = vadd.f32 %v310, %v482
    %v484 = vpop.f32.mrb[0].mxu0
    %485 = vmatprep.mubr.f32.mxu0 0.0
    %486 = vmatmul.mubr.f32.gmra.mrb[0].mxu0 %v355
    %v487 = vpop.f32.mrb[0].mxu0
    %v488 = vadd.f32 %v315, %v487
    %v489 = vpop.f32.mrb[0].mxu0
    %490 = vdwg.mxu0
    %v491 = vtanh.pop %v428
    %v492 = vtanh.pop %v433
    %v493 = vtanh.pop %v438
    %v494 = vtanh.pop %v443
    %v495 = vtanh.pop %v448
    %v496 = vtanh.pop %v453
    %v497 = vtanh.pop %v458
    %v498 = vtanh.pop %v463
    %v499 = vtanh.pop %v468
    %v500 = vtanh.pop %v473
    %v501 = vtanh.pop %v478
    %v502 = vtanh.pop %v483
    %v503 = vtanh.pop %v488
    %v504 = vld [vmem:[%s5] sm:$0x7f]
    %v505 = vld [vmem:[%s6] sm:$0x7f]
    %507 = vset.pattern.permute.xlu0 0
    %508 = vperm.xlu0 %507, %v505
    %v509 = vpop.permute.xlu0 %508
    %vm511 = vcmask 818176
    %v513 = vsel %vm511, %v504, 0
    %v516 = vsel %vm357, %v503, 0
    %518 = vmatprep.subr.mxu0 0.0
    %519 = vmatpush1.msra.mxu0 %v491
    %520 = vmatprep.subr.mxu0 0.0
    %521 = vmatpush1.msra.mxu0 %v492
    %522 = vmatprep.subr.mxu0 0.0
    %523 = vmatpush1.msra.mxu0 %v493
    %524 = vmatprep.subr.mxu0 0.0
    %525 = vmatpush1.msra.mxu0 %v494
    %526 = vmatprep.subr.mxu0 0.0
    %527 = vmatpush1.msra.mxu0 %v495
    %528 = vmatprep.subr.mxu0 0.0
    %529 = vmatpush1.msra.mxu0 %v496
    %530 = vmatprep.subr.mxu0 0.0
    %531 = vmatpush1.msra.mxu0 %v497
    %532 = vmatprep.subr.mxu0 0.0
    %533 = vmatpush1.msra.mxu0 %v498
    %534 = vmatprep.subr.mxu0 0.0
    %535 = vmatpush1.msra.mxu0 %v499
    %536 = vmatprep.subr.mxu0 0.0
    %537 = vmatpush1.msra.mxu0 %v500
    %538 = vmatprep.subr.mxu0 0.0
    %539 = vmatpush1.msra.mxu0 %v501
    %540 = vmatprep.subr.mxu0 0.0
    %541 = vmatpush1.msra.mxu0 %v502
    %542 = vmatprep.subr.mxu0 0.0
    %543 = vmatpush1.msra.mxu0 %v516
    %544 = vmatprep.subr.mxu0 0.0
    %545 = vmatpush1.msra.mxu0 0.0
    %546 = vmatprep.subr.mxu0 0.0
    %547 = vmatpush1.msra.mxu0 0.0
    %548 = vmatprep.subr.mxu0 0.0
    %549 = vmatpush1.msra.mxu0 0.0
    %550 = vmatprep.subr.mxu0 0.0
    %551 = vmatpush1.msra.mxu0 0.0
    %552 = vmatprep.subr.mxu0 0.0
    %553 = vmatpush1.msra.mxu0 0.0
    %554 = vmatprep.subr.mxu0 0.0
    %555 = vmatpush1.msra.mxu0 0.0
    %556 = vmatprep.subr.mxu0 0.0
    %557 = vmatpush1.msra.mxu0 0.0
    %558 = vmatprep.subr.mxu0 0.0
    %559 = vmatpush1.msra.mxu0 0.0
    %560 = vmatprep.subr.mxu0 0.0
    %561 = vmatpush1.msra.mxu0 0.0
    %562 = vmatprep.subr.mxu0 0.0
    %563 = vmatpush1.msra.mxu0 0.0
    %564 = vmatprep.subr.mxu0 0.0
    %565 = vmatpush1.msra.mxu0 0.0
    %566 = vmatprep.subr.mxu0 0.0
    %567 = vmatpush1.msra.mxu0 0.0
    %568 = vmatprep.subr.mxu0 0.0
    %569 = vmatpush1.msra.mxu0 0.0
    %570 = vmatprep.subr.mxu0 0.0
    %571 = vmatpush1.msra.mxu0 0.0
    %572 = vmatprep.subr.mxu0 0.0
    %573 = vmatpush1.msra.mxu0 0.0
    %574 = vmatprep.subr.mxu0 0.0
    %575 = vmatpush1.msra.mxu0 0.0
    %576 = vmatprep.subr.mxu0 0.0
    %577 = vmatpush1.msra.mxu0 0.0
    %578 = vmatprep.subr.mxu0 0.0
    %579 = vmatpush1.msra.mxu0 0.0
    %580 = vmatprep.subr.mxu0 0.0
    %581 = vmatpush1.msra.mxu0 0.0
    %582 = vmatprep.mubr.f32.mxu0 0.0
    %583 = vmatmul.mubr.f32.gmra.mrb[0].mxu0 %v513
    %v584 = vpop.f32.mrb[0].mxu0
    %v585 = vadd.f32 %v509, %v584
    %v586 = vpop.f32.mrb[0].mxu0
    %587 = vdwg.mxu0
    %v588 = vtanh.pop %v585
    %vm589 = vcmask 63488
    %590 = vst.msk [vmem:[#allocation2] sm:$0x7f] %vm589, %v588
    // Predicated region
    $region30: #{tpu_custom_call.1} parent=1 // pred_check
      _
    $region31: #{tpu_custom_call.1} parent=1 // pred_check_branch
      %592 = sbr.rel (0) target = $region33
    $region32: #{tpu_custom_call.1} parent=1 // pred_region
      %s594 = ssub.s32 128, 128
      %595 = vsyncadd [#allocation3], %s594
      %s597 = sshll.u32 [#allocation2], 4
      %s598 = int_to_ptr.vmem [resolvable:$true] %s597
      %600 = dma.vmem_to_hbm [thread:$0]  %s598, 128, %s7, [#allocation3]
    $region33: #{tpu_custom_call.1} parent=1 // pred_fallthru
      _
    // Predicated region
    $region34: #{tpu_custom_call.1} parent=1 // pred_check
      _
    $region35: #{tpu_custom_call.1} parent=1 // pred_check_branch
      %602 = sbr.rel (0) target = $region37
    $region36: #{tpu_custom_call.1} parent=1 // pred_region
      %603 = dma.done [#allocation3], 128
    $region37: #{tpu_custom_call.1} parent=1 // pred_fallthru
      _
    %604 = vsyncpa [#allocation3], 1

</llo_original>
